<compile_context>
chip_gen: v6e
topology: v6e:2x2x1
jax: 0.10.0
libtpu: 0.0.40
codegen_flags: <defaults>
</compile_context>

<pallas_src>
import jax
import jax.numpy as jnp
from jax.experimental import pallas as pl
from jax.experimental.pallas import tpu as pltpu

HL_SIZE = 10     # logical hidden width of the PyTorch module
HL_PAD = 128     # hidden width padded to one full lane group (zero pads => exact)


def _round_up(x, m):
    return (x + m - 1) // m * m


def classifier_kernel(x_ref, w1_ref, b1_ref, w2_ref, b2_ref, w3_ref, b3_ref, o_ref):
    """One (TB, F) batch tile of the 3-layer MLP.

    Weight refs use constant index_maps -> DMA'd once, resident in VMEM; only
    the x / out tiles stream (double-buffered by the Pallas pipeline).
    """
    x = x_ref[...]                                                   # (TB, F) f32

    # Layer 1: (TB, F) @ (F, 128) on the MXU, f32 accumulate; bias + ReLU on VPU.
    h1 = jnp.dot(x, w1_ref[...], preferred_element_type=jnp.float32) + b1_ref[...]
    h1 = jnp.maximum(h1, 0.0)

    # Layer 2: (TB, 128) @ (128, F). Padded hidden rows/cols are exactly zero.
    h2 = jnp.dot(h1, w2_ref[...], preferred_element_type=jnp.float32) + b2_ref[...]
    h2 = jnp.maximum(h2, 0.0)

    # Layer 3 (F -> 1): per-lane multiply (VPU) + lane reduce (XLU). Produces only
    # the real (TB, 1) column; no 1 -> 128 padding in VMEM or HBM.
    z = jnp.sum(h2 * w3_ref[...], axis=-1, keepdims=True) + b3_ref[...]

    # Sigmoid on the (TB, 1) column only (exp on EUP; exact reciprocal).
    o_ref[...] = 1.0 / (1.0 + jnp.exp(-z))


def classifier_forward(x, params, *, block_b=1024):
    """Forward pass of the Classifier. x: (B, F) float32. Returns (B, 1) float32."""
    w1, b1, w2, b2, w3, b3 = params
    B, F = x.shape
    f32 = jnp.float32

    # --- Weights: hidden 10 -> 128 zero-pad (exact); layer-3 weight as a (1, F)
    #     row for the in-kernel lane reduce. All weights stay resident in VMEM.
    w1p = jnp.zeros((F, HL_PAD), f32).at[:, :HL_SIZE].set(w1.astype(f32))
    b1p = jnp.zeros((1, HL_PAD), f32).at[:, :HL_SIZE].set(b1.reshape(1, HL_SIZE).astype(f32))
    w2p = jnp.zeros((HL_PAD, F), f32).at[:HL_SIZE, :].set(w2.astype(f32))
    b2p = b2.reshape(1, F).astype(f32)
    w3p = w3.reshape(1, F).astype(f32)
    b3p = b3.reshape(1, 1).astype(f32)

    weight_bytes = 4 * (w1p.size + b1p.size + w2p.size + b2p.size + w3p.size + b3p.size)

    # --- Generation-aware VMEM budget (v7x: 64 MiB/TC; v5e/v6e: 128 MiB).
    try:
        vmem_cap = int(pltpu.get_tpu_info().vmem_capacity_bytes)
    except Exception:
        vmem_cap = 64 * 2**20                      # conservative fallback
    budget = min(int(0.75 * vmem_cap), 100 * 2**20)

    # Per-row VMEM cost: double-buffered x + out tiles plus the f32 intermediates
    # (h1: 128 lanes, h2 and the layer-3 product: F lanes each, + slack).
    per_row = 4 * (2 * F + 2 + HL_PAD + 2 * F + 16)

    # --- Batch tiling: sublane-align, cap by the VMEM budget, and prefer a tile
    #     that divides the (sublane-rounded) batch so x never needs a padded copy.
    b_pad8 = _round_up(B, 8)
    tb = max(8, min(_round_up(block_b, 8), b_pad8))
    tb_cap = (budget // 2 - weight_bytes) // per_row
    tb = max(8, min(tb, (max(tb_cap, 8) // 8) * 8))
    if b_pad8 % tb != 0:
        for cand in range(tb, max(tb // 2, 8) - 8, -8):
            if b_pad8 % cand == 0:
                tb = cand
                break
    b_pad = _round_up(b_pad8, tb)                  # == b_pad8 when a divisor was found
    n_tiles = b_pad // tb

    x_in = x if b_pad == B else jnp.pad(x, ((0, b_pad - B), (0, 0)))

    est = weight_bytes + tb * per_row
    vmem_limit = int(min(budget, max(32 * 2**20, 2 * est)))

    cost = pl.CostEstimate(
        flops=2 * b_pad * (F * HL_PAD + HL_PAD * F + F),
        transcendentals=b_pad,
        bytes_accessed=b_pad * F * 4 + b_pad * 4 + weight_bytes,
    )

    # Constant index_map => block never changes => DMA'd once, resident in VMEM.
    resident = lambda a: pl.BlockSpec(a.shape, lambda i: (0, 0))

    out = pl.pallas_call(
        classifier_kernel,
        out_shape=jax.ShapeDtypeStruct((b_pad, 1), f32),
        grid_spec=pltpu.PrefetchScalarGridSpec(
            num_scalar_prefetch=0,
            grid=(n_tiles,),
            in_specs=[pl.BlockSpec((tb, F), lambda i: (i, 0)),
                      resident(w1p), resident(b1p),
                      resident(w2p), resident(b2p),
                      resident(w3p), resident(b3p)],
            out_specs=pl.BlockSpec((tb, 1), lambda i: (i, 0)),
        ),
        compiler_params=pltpu.CompilerParams(
            dimension_semantics=("parallel",),     # batch tiles shard across v7x's 2 TCs
            vmem_limit_bytes=vmem_limit,
        ),
        cost_estimate=cost,
    )(x_in, w1p, b1p, w2p, b2p, w3p, b3p)

    return out[:B] if b_pad != B else out


def init_params(key, num_features):
    # Deterministic synthetic init (PyTorch-style uniform ranges), stored as
    # (in, out) so the kernel uses y = x @ W + b.
    k1, k2, k3, k4, k5, k6 = jax.random.split(key, 6)

    def lin(kw, kb, fan_in, fan_out):
        bound = 1.0 / jnp.sqrt(fan_in)
        w = jax.random.uniform(kw, (fan_in, fan_out), jnp.float32, -bound, bound)
        b = jax.random.uniform(kb, (1, fan_out), jnp.float32, -bound, bound)
        return w, b

    w1, b1 = lin(k1, k2, num_features, HL_SIZE)
    w2, b2 = lin(k3, k4, HL_SIZE, num_features)
    w3, b3 = lin(k5, k6, num_features, 1)
    return (w1, b1, w2, b2, w3, b3)


def reference_forward(x, params):
    w1, b1, w2, b2, w3, b3 = params
    h1 = jnp.maximum(x @ w1 + b1, 0.0)
    h2 = jnp.maximum(h1 @ w2 + b2, 0.0)
    return jax.nn.sigmoid(h2 @ w3 + b3)


if __name__ == "__main__":
    key = jax.random.PRNGKey(0)
    kx, kp, kx2 = jax.random.split(key, 3)

    batch, num_features = 8, 16
    x = jax.random.normal(kx, (batch, num_features), jnp.float32)
    params = init_params(kp, num_features)

    # Single-tile path.
    out = jax.block_until_ready(classifier_forward(x, params))
    ref = reference_forward(x, params)
    assert out.shape == (batch, 1)
    assert jnp.allclose(out, ref, atol=2e-3, rtol=2e-3), "single-tile mismatch vs reference"

    # Ragged batch + multi-step grid (tb=8 -> two tiles; 3 pad rows sliced off).
    batch2 = 13
    x2 = jax.random.normal(kx2, (batch2, num_features), jnp.float32)
    out2 = jax.block_until_ready(classifier_forward(x2, params, block_b=8))
    ref2 = reference_forward(x2, params)
    assert out2.shape == (batch2, 1)
    assert jnp.allclose(out2, ref2, atol=2e-3, rtol=2e-3), "multi-tile mismatch vs reference"

    print("KERNEL_OK")
</pallas_src>

<mosaic_0001>
module attributes {stable_mosaic.version = 11 : i64} {
  func.func @classifier_kernel(%arg0: i32, %arg1: memref<8x16xf32, #tpu.memory_space<vmem>>, %arg2: memref<16x128xf32, #tpu.memory_space<vmem>>, %arg3: memref<1x128xf32, #tpu.memory_space<vmem>>, %arg4: memref<128x16xf32, #tpu.memory_space<vmem>>, %arg5: memref<1x16xf32, #tpu.memory_space<vmem>>, %arg6: memref<1x16xf32, #tpu.memory_space<vmem>>, %arg7: memref<1x1xf32, #tpu.memory_space<vmem>>, %arg8: memref<8x1xf32, #tpu.memory_space<vmem>>) attributes {dimension_semantics = [#tpu.dimension_semantics<parallel>], iteration_bounds = array<i64: 1>, scalar_prefetch = 0 : i64, scratch_operands = 0 : i64, tpu.core_type = #tpu.core_type<tc>, window_params = [{transform_indices = @transform_0, window_bounds = array<i64: 8, 16>}, {pipeline_mode = #tpu.pipeline_mode<synchronous>, transform_indices = @transform_1, window_bounds = array<i64: 16, 128>}, {pipeline_mode = #tpu.pipeline_mode<synchronous>, transform_indices = @transform_2, window_bounds = array<i64: 1, 128>}, {pipeline_mode = #tpu.pipeline_mode<synchronous>, transform_indices = @transform_3, window_bounds = array<i64: 128, 16>}, {pipeline_mode = #tpu.pipeline_mode<synchronous>, transform_indices = @transform_4, window_bounds = array<i64: 1, 16>}, {pipeline_mode = #tpu.pipeline_mode<synchronous>, transform_indices = @transform_5, window_bounds = array<i64: 1, 16>}, {pipeline_mode = #tpu.pipeline_mode<synchronous>, transform_indices = @transform_6, window_bounds = array<i64: 1, 1>}, {transform_indices = @transform_7, window_bounds = array<i64: 8, 1>}]} {
    %c0 = arith.constant 0 : index
    %c0_0 = arith.constant 0 : index
    %0 = vector.load %arg1[%c0, %c0_0] : memref<8x16xf32, #tpu.memory_space<vmem>>, vector<8x16xf32>
    %c0_1 = arith.constant 0 : index
    %c0_2 = arith.constant 0 : index
    %1 = vector.load %arg2[%c0_1, %c0_2] : memref<16x128xf32, #tpu.memory_space<vmem>>, vector<16x128xf32>
    %cst = arith.constant dense<0.000000e+00> : vector<8x128xf32>
    %2 = tpu.matmul %0, %1, %cst {dimension_numbers = #tpu.dot_dimension_numbers<[1], [0], [0], [1], [0, 0, 1, 1], [], []>} : vector<8x16xf32>, vector<16x128xf32>, vector<8x128xf32> -> vector<8x128xf32>
    %c0_3 = arith.constant 0 : index
    %c0_4 = arith.constant 0 : index
    %3 = vector.load %arg3[%c0_3, %c0_4] : memref<1x128xf32, #tpu.memory_space<vmem>>, vector<1x128xf32>
    %4 = vector.broadcast %3 : vector<1x128xf32> to vector<8x128xf32>
    %5 = arith.addf %2, %4 : vector<8x128xf32>
    %cst_5 = arith.constant 0.000000e+00 : f32
    %6 = vector.broadcast %cst_5 : f32 to vector<8x128xf32>
    %7 = arith.maximumf %5, %6 : vector<8x128xf32>
    %c0_6 = arith.constant 0 : index
    %c0_7 = arith.constant 0 : index
    %8 = vector.load %arg4[%c0_6, %c0_7] : memref<128x16xf32, #tpu.memory_space<vmem>>, vector<128x16xf32>
    %cst_8 = arith.constant dense<0.000000e+00> : vector<8x16xf32>
    %9 = tpu.matmul %7, %8, %cst_8 {dimension_numbers = #tpu.dot_dimension_numbers<[1], [0], [0], [1], [0, 0, 1, 1], [], []>} : vector<8x128xf32>, vector<128x16xf32>, vector<8x16xf32> -> vector<8x16xf32>
    %c0_9 = arith.constant 0 : index
    %c0_10 = arith.constant 0 : index
    %10 = vector.load %arg5[%c0_9, %c0_10] : memref<1x16xf32, #tpu.memory_space<vmem>>, vector<1x16xf32>
    %11 = vector.broadcast %10 : vector<1x16xf32> to vector<8x16xf32>
    %12 = arith.addf %9, %11 : vector<8x16xf32>
    %cst_11 = arith.constant 0.000000e+00 : f32
    %13 = vector.broadcast %cst_11 : f32 to vector<8x16xf32>
    %14 = arith.maximumf %12, %13 : vector<8x16xf32>
    %c0_12 = arith.constant 0 : index
    %c0_13 = arith.constant 0 : index
    %15 = vector.load %arg6[%c0_12, %c0_13] : memref<1x16xf32, #tpu.memory_space<vmem>>, vector<1x16xf32>
    %16 = vector.broadcast %15 : vector<1x16xf32> to vector<8x16xf32>
    %17 = arith.mulf %14, %16 : vector<8x16xf32>
    %cst_14 = arith.constant dense<0.000000e+00> : vector<8xf32>
    %18 = vector.multi_reduction <add>, %17, %cst_14 [1] : vector<8x16xf32> to vector<8xf32>
    %19 = vector.shape_cast %18 : vector<8xf32> to vector<8x1xf32>
    %c0_15 = arith.constant 0 : index
    %c0_16 = arith.constant 0 : index
    %20 = vector.load %arg7[%c0_15, %c0_16] : memref<1x1xf32, #tpu.memory_space<vmem>>, vector<1x1xf32>
    %21 = vector.broadcast %20 : vector<1x1xf32> to vector<8x1xf32>
    %22 = arith.addf %19, %21 : vector<8x1xf32>
    %cst_17 = arith.constant 0.000000e+00 : f32
    %23 = vector.broadcast %cst_17 : f32 to vector<8x1xf32>
    %24 = arith.subf %23, %22 : vector<8x1xf32>
    %25 = math.exp %24 : vector<8x1xf32>
    %cst_18 = arith.constant 1.000000e+00 : f32
    %26 = vector.broadcast %cst_18 : f32 to vector<8x1xf32>
    %27 = arith.addf %26, %25 : vector<8x1xf32>
    %cst_19 = arith.constant 1.000000e+00 : f32
    %28 = vector.broadcast %cst_19 : f32 to vector<8x1xf32>
    %29 = arith.divf %28, %27 : vector<8x1xf32>
    %c0_20 = arith.constant 0 : index
    %c0_21 = arith.constant 0 : index
    %30 = vector.load %arg8[%c0_20, %c0_21] : memref<8x1xf32, #tpu.memory_space<vmem>>, vector<8x1xf32>
    tpu.vector_store %arg8[%c0_20, %c0_21], %29 {strides = array<i32>} : memref<8x1xf32, #tpu.memory_space<vmem>>, vector<8x1xf32>,
    return
  }
  func.func @transform_0(%arg0: i32) -> (i32, i32) {
    %c0_i32 = arith.constant 0 : i32
    %c0_i32_0 = arith.constant 0 : i32
    return %arg0, %c0_i32 : i32, i32
  }
  func.func @transform_1(%arg0: i32) -> (i32, i32) {
    %c0_i32 = arith.constant 0 : i32
    %c0_i32_0 = arith.constant 0 : i32
    %c0_i32_1 = arith.constant 0 : i32
    return %c0_i32, %c0_i32_0 : i32, i32
  }
  func.func @transform_2(%arg0: i32) -> (i32, i32) {
    %c0_i32 = arith.constant 0 : i32
    %c0_i32_0 = arith.constant 0 : i32
    %c0_i32_1 = arith.constant 0 : i32
    return %c0_i32, %c0_i32_0 : i32, i32
  }
  func.func @transform_3(%arg0: i32) -> (i32, i32) {
    %c0_i32 = arith.constant 0 : i32
    %c0_i32_0 = arith.constant 0 : i32
    %c0_i32_1 = arith.constant 0 : i32
    return %c0_i32, %c0_i32_0 : i32, i32
  }
  func.func @transform_4(%arg0: i32) -> (i32, i32) {
    %c0_i32 = arith.constant 0 : i32
    %c0_i32_0 = arith.constant 0 : i32
    %c0_i32_1 = arith.constant 0 : i32
    return %c0_i32, %c0_i32_0 : i32, i32
  }
  func.func @transform_5(%arg0: i32) -> (i32, i32) {
    %c0_i32 = arith.constant 0 : i32
    %c0_i32_0 = arith.constant 0 : i32
    %c0_i32_1 = arith.constant 0 : i32
    return %c0_i32, %c0_i32_0 : i32, i32
  }
  func.func @transform_6(%arg0: i32) -> (i32, i32) {
    %c0_i32 = arith.constant 0 : i32
    %c0_i32_0 = arith.constant 0 : i32
    %c0_i32_1 = arith.constant 0 : i32
    return %c0_i32, %c0_i32_0 : i32, i32
  }
  func.func @transform_7(%arg0: i32) -> (i32, i32) {
    %c0_i32 = arith.constant 0 : i32
    %c0_i32_0 = arith.constant 0 : i32
    return %arg0, %c0_i32 : i32, i32
  }
}

</mosaic_0001>

<llo_original>
// kernel: tpu_custom_call.1
$region0: #{tpu_custom_call.1}
  #allocation0 [shape = 'u32[]', space=smem, size = 0x4, offset = 0x4, fixed_abs, tag = 'smem constant byte address 0x4 - core index']
  #allocation1 [shape = 'u32[144,128]{1,0:T(1,128)}', space=vmem, size = 0x12000, scoped, tag = 'internal scratch']
  #allocation2 [shape = 'f32[1,1]{1,0:T(1,128)S(1)}', space=vmem, size = 0x200, scoped, tag = 'scoped memory for tpu_custom_call.1']
  %s0 = inlined_call_operand.vmem [shape: f32[8,16], index: 0, kind: input, shape index: {}]
  %s1 = inlined_call_operand.vmem [shape: f32[16,128], index: 1, kind: input, shape index: {}]
  %s2 = inlined_call_operand.vmem [shape: f32[1,128], index: 2, kind: input, shape index: {}]
  %s3 = inlined_call_operand.vmem [shape: f32[128,16], index: 3, kind: input, shape index: {}]
  %s4 = inlined_call_operand.vmem [shape: f32[1,16], index: 4, kind: input, shape index: {}]
  %s5 = inlined_call_operand.vmem [shape: f32[1,16], index: 5, kind: input, shape index: {}]
  %s6 = inlined_call_operand.<no memory space> [shape: f32[1,1], index: 6, kind: input, shape index: {}]
  %s7 = inlined_call_operand.vmem [shape: f32[8,1], index: 7, kind: output, shape index: {}]
  %s8 = sld [smem:[#allocation0]]
  $region38: #{tpu_custom_call.1} parent=0
    _
  %s10 = ssub.s32 1, %s8
  %s11 = scalar_select 0, %s10, %s8
  %v12 = vstv %s6
  %13 = vst [vmem:[#allocation2] sm:$0x1] %v12
  // Predicated region
  $region2: #{tpu_custom_call.1} parent=0 // pred_check
    _
  $region3: #{tpu_custom_call.1} parent=0 // pred_check_branch
    %15 = sbr.rel (0) target = $region5
  $region4: #{tpu_custom_call.1} parent=0 // pred_region
    _
  $region5: #{tpu_custom_call.1} parent=0 // pred_fallthru
    _
  // Predicated region
  $region6: #{tpu_custom_call.1} parent=0 // pred_check
    _
  $region7: #{tpu_custom_call.1} parent=0 // pred_check_branch
    %17 = sbr.rel (0) target = $region9
  $region8: #{tpu_custom_call.1} parent=0 // pred_region
    _
  $region9: #{tpu_custom_call.1} parent=0 // pred_fallthru
    _
  // Predicated region
  $region10: #{tpu_custom_call.1} parent=0 // pred_check
    _
  $region11: #{tpu_custom_call.1} parent=0 // pred_check_branch
    %19 = sbr.rel (0) target = $region13
  $region12: #{tpu_custom_call.1} parent=0 // pred_region
    _
  $region13: #{tpu_custom_call.1} parent=0 // pred_fallthru
    _
  // Predicated region
  $region14: #{tpu_custom_call.1} parent=0 // pred_check
    _
  $region15: #{tpu_custom_call.1} parent=0 // pred_check_branch
    %21 = sbr.rel (0) target = $region17
  $region16: #{tpu_custom_call.1} parent=0 // pred_region
    _
  $region17: #{tpu_custom_call.1} parent=0 // pred_fallthru
    _
  // Predicated region
  $region18: #{tpu_custom_call.1} parent=0 // pred_check
    _
  $region19: #{tpu_custom_call.1} parent=0 // pred_check_branch
    %23 = sbr.rel (0) target = $region21
  $region20: #{tpu_custom_call.1} parent=0 // pred_region
    _
  $region21: #{tpu_custom_call.1} parent=0 // pred_fallthru
    _
  // Predicated region
  $region22: #{tpu_custom_call.1} parent=0 // pred_check
    _
  $region23: #{tpu_custom_call.1} parent=0 // pred_check_branch
    %25 = sbr.rel (0) target = $region25
  $region24: #{tpu_custom_call.1} parent=0 // pred_region
    _
  $region25: #{tpu_custom_call.1} parent=0 // pred_fallthru
    _
  // Predicated region
  $region26: #{tpu_custom_call.1} parent=0 // pred_check
    _
  $region27: #{tpu_custom_call.1} parent=0 // pred_check_branch
    %27 = sbr.rel (0) target = $region29
  $region28: #{tpu_custom_call.1} parent=0 // pred_region
    _
  $region29: #{tpu_custom_call.1} parent=0 // pred_fallthru
    _
  %v28 = vld [vmem:[%s0] sm:$0xff]
  %v29 = vld [vmem:[%s1] sm:$0xff]
  %v30 = vld [vmem:[%s1 + $0x8] sm:$0xff]
  %v31 = vld [vmem:[%s2] sm:$0x1]
  %v33 = vlaneseq
  %v34 = vshrl.u32 %v33, 7
  %v35 = vsub.s32 0, %v34
  %v36 = vrot.slane %v31, %v35
  %vm38 = vcmask 130048
  %v40 = vsel %vm38, %v28, 0
  %42 = vmatprep.subr.mxu0 0.0
  %43 = vmatpush1.msra.mxu0 0.0
  %44 = vmatprep.subr.mxu0 0.0
  %45 = vmatpush1.msra.mxu0 0.0
  %46 = vmatprep.subr.mxu0 0.0
  %47 = vmatpush1.msra.mxu0 0.0
  %48 = vmatprep.subr.mxu0 0.0
  %49 = vmatpush1.msra.mxu0 0.0
  %50 = vmatprep.subr.mxu0 0.0
  %51 = vmatpush1.msra.mxu0 0.0
  %52 = vmatprep.subr.mxu0 0.0
  %53 = vmatpush1.msra.mxu0 0.0
  %54 = vmatprep.subr.mxu0 0.0
  %55 = vmatpush1.msra.mxu0 0.0
  %56 = vmatprep.subr.mxu0 0.0
  %57 = vmatpush1.msra.mxu0 0.0
  %58 = vmatprep.subr.mxu0 0.0
  %59 = vmatpush1.msra.mxu0 0.0
  %60 = vmatprep.subr.mxu0 0.0
  %61 = vmatpush1.msra.mxu0 0.0
  %62 = vmatprep.subr.mxu0 0.0
  %63 = vmatpush1.msra.mxu0 0.0
  %64 = vmatprep.subr.mxu0 0.0
  %65 = vmatpush1.msra.mxu0 0.0
  %66 = vmatprep.subr.mxu0 0.0
  %67 = vmatpush1.msra.mxu0 0.0
  %68 = vmatprep.subr.mxu0 0.0
  %69 = vmatpush1.msra.mxu0 0.0
  %70 = vmatprep.subr.mxu0 0.0
  %71 = vmatpush1.msra.mxu0 %v30
  %72 = vmatprep.subr.mxu0 0.0
  %73 = vmatpush1.msra.mxu0 %v29
  %74 = vmatprep.subr.mxu0 0.0
  %75 = vmatpush2.msra.mxu0 0.0
  %76 = vmatprep.subr.mxu0 0.0
  %77 = vmatpush2.msra.mxu0 0.0
  %78 = vmatprep.subr.mxu0 0.0
  %79 = vmatpush2.msra.mxu0 0.0
  %80 = vmatprep.subr.mxu0 0.0
  %81 = vmatpush2.msra.mxu0 0.0
  %82 = vmatprep.subr.mxu0 0.0
  %83 = vmatpush2.msra.mxu0 0.0
  %84 = vmatprep.subr.mxu0 0.0
  %85 = vmatpush2.msra.mxu0 0.0
  %86 = vmatprep.subr.mxu0 0.0
  %87 = vmatpush2.msra.mxu0 0.0
  %88 = vmatprep.subr.mxu0 0.0
  %89 = vmatpush2.msra.mxu0 0.0
  %90 = vmatprep.subr.mxu0 0.0
  %91 = vmatpush2.msra.mxu0 0.0
  %92 = vmatprep.subr.mxu0 0.0
  %93 = vmatpush2.msra.mxu0 0.0
  %94 = vmatprep.subr.mxu0 0.0
  %95 = vmatpush2.msra.mxu0 0.0
  %96 = vmatprep.subr.mxu0 0.0
  %97 = vmatpush2.msra.mxu0 0.0
  %98 = vmatprep.subr.mxu0 0.0
  %99 = vmatpush2.msra.mxu0 0.0
  %100 = vmatprep.subr.mxu0 0.0
  %101 = vmatpush2.msra.mxu0 0.0
  %102 = vmatprep.subr.mxu0 0.0
  %103 = vmatpush2.msra.mxu0 0.0
  %104 = vmatprep.subr.mxu0 0.0
  %105 = vmatpush2.msra.mxu0 0.0
  %106 = vmatprep.mubr.f32.mxu0 0.0
  %107 = vmatmul.mubr.f32.gmra.mxu0 %v40
  %v108 = vpop.f32.mrf.mxu0
  %v109 = vadd.f32 %v36, %v108
  %v110 = vpop.f32.mrf.mxu0
  %111 = vdwg.mxu0
  %v112 = vmax.f32 %v109, 0.0
  %v113 = vld [vmem:[%s3] sm:$0xff]
  %v114 = vld [vmem:[%s3 + $0x8] sm:$0xff]
  %v115 = vld [vmem:[%s3 + $0x10] sm:$0xff]
  %v116 = vld [vmem:[%s3 + $0x18] sm:$0xff]
  %v117 = vld [vmem:[%s3 + $0x20] sm:$0xff]
  %v118 = vld [vmem:[%s3 + $0x28] sm:$0xff]
  %v119 = vld [vmem:[%s3 + $0x30] sm:$0xff]
  %v120 = vld [vmem:[%s3 + $0x38] sm:$0xff]
  %v121 = vld [vmem:[%s3 + $0x40] sm:$0xff]
  %v122 = vld [vmem:[%s3 + $0x48] sm:$0xff]
  %v123 = vld [vmem:[%s3 + $0x50] sm:$0xff]
  %v124 = vld [vmem:[%s3 + $0x58] sm:$0xff]
  %v125 = vld [vmem:[%s3 + $0x60] sm:$0xff]
  %v126 = vld [vmem:[%s3 + $0x68] sm:$0xff]
  %v127 = vld [vmem:[%s3 + $0x70] sm:$0xff]
  %v128 = vld [vmem:[%s3 + $0x78] sm:$0xff]
  %v129 = vld [vmem:[%s4] sm:$0x1]
  %v131 = vlaneseq
  %v132 = vshrl.u32 %v131, 7
  %v133 = vsub.s32 0, %v132
  %v134 = vrot.slane %v129, %v133
  %136 = vmatprep.subr.mxu0 0.0
  %137 = vmatpush1.msra.mxu0 %v128
  %138 = vmatprep.subr.mxu0 0.0
  %139 = vmatpush1.msra.mxu0 %v127
  %140 = vmatprep.subr.mxu0 0.0
  %141 = vmatpush1.msra.mxu0 %v126
  %142 = vmatprep.subr.mxu0 0.0
  %143 = vmatpush1.msra.mxu0 %v125
  %144 = vmatprep.subr.mxu0 0.0
  %145 = vmatpush1.msra.mxu0 %v124
  %146 = vmatprep.subr.mxu0 0.0
  %147 = vmatpush1.msra.mxu0 %v123
  %148 = vmatprep.subr.mxu0 0.0
  %149 = vmatpush1.msra.mxu0 %v122
  %150 = vmatprep.subr.mxu0 0.0
  %151 = vmatpush1.msra.mxu0 %v121
  %152 = vmatprep.subr.mxu0 0.0
  %153 = vmatpush1.msra.mxu0 %v120
  %154 = vmatprep.subr.mxu0 0.0
  %155 = vmatpush1.msra.mxu0 %v119
  %156 = vmatprep.subr.mxu0 0.0
  %157 = vmatpush1.msra.mxu0 %v118
  %158 = vmatprep.subr.mxu0 0.0
  %159 = vmatpush1.msra.mxu0 %v117
  %160 = vmatprep.subr.mxu0 0.0
  %161 = vmatpush1.msra.mxu0 %v116
  %162 = vmatprep.subr.mxu0 0.0
  %163 = vmatpush1.msra.mxu0 %v115
  %164 = vmatprep.subr.mxu0 0.0
  %165 = vmatpush1.msra.mxu0 %v114
  %166 = vmatprep.subr.mxu0 0.0
  %167 = vmatpush1.msra.mxu0 %v113
  %168 = vmatprep.subr.mxu0 0.0
  %169 = vmatpush2.msra.mxu0 0.0
  %170 = vmatprep.subr.mxu0 0.0
  %171 = vmatpush2.msra.mxu0 0.0
  %172 = vmatprep.subr.mxu0 0.0
  %173 = vmatpush2.msra.mxu0 0.0
  %174 = vmatprep.subr.mxu0 0.0
  %175 = vmatpush2.msra.mxu0 0.0
  %176 = vmatprep.subr.mxu0 0.0
  %177 = vmatpush2.msra.mxu0 0.0
  %178 = vmatprep.subr.mxu0 0.0
  %179 = vmatpush2.msra.mxu0 0.0
  %180 = vmatprep.subr.mxu0 0.0
  %181 = vmatpush2.msra.mxu0 0.0
  %182 = vmatprep.subr.mxu0 0.0
  %183 = vmatpush2.msra.mxu0 0.0
  %184 = vmatprep.subr.mxu0 0.0
  %185 = vmatpush2.msra.mxu0 0.0
  %186 = vmatprep.subr.mxu0 0.0
  %187 = vmatpush2.msra.mxu0 0.0
  %188 = vmatprep.subr.mxu0 0.0
  %189 = vmatpush2.msra.mxu0 0.0
  %190 = vmatprep.subr.mxu0 0.0
  %191 = vmatpush2.msra.mxu0 0.0
  %192 = vmatprep.subr.mxu0 0.0
  %193 = vmatpush2.msra.mxu0 0.0
  %194 = vmatprep.subr.mxu0 0.0
  %195 = vmatpush2.msra.mxu0 0.0
  %196 = vmatprep.subr.mxu0 0.0
  %197 = vmatpush2.msra.mxu0 0.0
  %198 = vmatprep.subr.mxu0 0.0
  %199 = vmatpush2.msra.mxu0 0.0
  %200 = vmatprep.mubr.f32.mxu0 0.0
  %201 = vmatmul.mubr.f32.gmra.mxu0 %v112
  %v202 = vpop.f32.mrf.mxu0
  %v203 = vadd.f32 %v134, %v202
  %v204 = vpop.f32.mrf.mxu0
  %205 = vdwg.mxu0
  %v206 = vmax.f32 %v203, 0.0
  %v207 = vld [vmem:[%s5] sm:$0x1]
  %v209 = vlaneseq
  %v210 = vshrl.u32 %v209, 7
  %v211 = vsub.s32 0, %v210
  %v212 = vrot.slane %v207, %v211
  %v214 = vmul.f32 %v206, %v212
  %v215 = vsel %vm38, %v214, 0.0
  %216 = vadd.xlane.f32.xlu0 %v215
  %v217 = vpop.xlane.xlu0 %216
  %v218 = vld [vmem:[#allocation2] sm:$0x1]
  %v220 = vlaneseq
  %v221 = vshrl.u32 %v220, 7
  %v222 = vsub.s32 0, %v221
  %v223 = vrot.slane %v218, %v222
  %v225 = vadd.f32 %v217, %v223
  %v226 = vsub.f32 0.0, %v225
  %v227 = vmul.f32 %v226, 1.442695
  %v228 = vpow.pop %v227
  %v229 = vadd.f32 %v228, 1.0
  %v230 = vrcp.pop %v229
  %v231 = vmul.f32 1.0, %v230
  %vm232 = vcmask 7168
  %233 = vst.msk [vmem:[%s7] sm:$0xff] %vm232, %v231
  // Predicated region
  $region30: #{tpu_custom_call.1} parent=0 // pred_check
    _
  $region31: #{tpu_custom_call.1} parent=0 // pred_check_branch
    %235 = sbr.rel (0) target = $region33
  $region32: #{tpu_custom_call.1} parent=0 // pred_region
    _
  $region33: #{tpu_custom_call.1} parent=0 // pred_fallthru
    _
  // Predicated region
  $region34: #{tpu_custom_call.1} parent=0 // pred_check
    _
  $region35: #{tpu_custom_call.1} parent=0 // pred_check_branch
    %237 = sbr.rel (0) target = $region37
  $region36: #{tpu_custom_call.1} parent=0 // pred_region
    _
  $region37: #{tpu_custom_call.1} parent=0 // pred_fallthru
    _

</llo_original>
